<compile_context>
chip_gen: v7x
topology: tpu7x:2x2x1
jax: 0.10.0
libtpu: 0.0.40
codegen_flags: <defaults>
</compile_context>

<pallas_src>
import math
import functools

import jax
import jax.numpy as jnp
from jax.experimental import pallas as pl
from jax.experimental.pallas import tpu as pltpu


# --------------------------------------------------------------------------
# Kernel
# --------------------------------------------------------------------------
def _pe_add_dropout_kernel(seed_ref, x_ref, pe_ref, o_ref, *,
                           p, training, tile_rows, batch, d_model):
    # x_ref: (tS, B, D) VMEM tile; pe_ref: (tS, 1, D) VMEM tile -> broadcast
    # add over the batch (sublane) axis.  D maps to lanes: for realistic
    # transformer widths (D a multiple of 128) stores are lane-dense.
    y = x_ref[...] + pe_ref[...]

    if training and p > 0.0:
        if p >= 1.0:
            # PyTorch nn.Dropout(p=1) zeroes everything in training mode.
            o_ref[...] = jnp.zeros_like(o_ref)
            return

        shp = y.shape
        # Global element index (unique per element across the whole grid, and
        # across the two v7x TensorCores, since program_id is folded in).
        s_idx = jax.lax.broadcasted_iota(jnp.int32, shp, 0).astype(jnp.uint32)
        b_idx = jax.lax.broadcasted_iota(jnp.int32, shp, 1).astype(jnp.uint32)
        d_idx = jax.lax.broadcasted_iota(jnp.int32, shp, 2).astype(jnp.uint32)
        tile_base = (pl.program_id(0) * (tile_rows * batch * d_model)).astype(jnp.uint32)
        seed_u = seed_ref[0].astype(jnp.uint32)

        h = (s_idx * jnp.uint32(batch * d_model)
             + b_idx * jnp.uint32(d_model)
             + d_idx
             + tile_base
             + seed_u * jnp.uint32(0x9E3779B9))
        # murmur3 32-bit finalizer (good avalanche on sequential inputs).
        h = h ^ (h >> 16)
        h = h * jnp.uint32(0x85EBCA6B)
        h = h ^ (h >> 13)
        h = h * jnp.uint32(0xC2B2AE35)
        h = h ^ (h >> 16)

        # Integer-threshold compare: keep w.p. (1 - p), scale by 1/(1 - p).
        threshold = jnp.uint32(min(int(round(p * 4294967296.0)), 4294967295))
        keep = h >= threshold
        scale = jnp.asarray(1.0 / (1.0 - p), dtype=y.dtype)
        y = jnp.where(keep, y * scale, jnp.zeros_like(y))

    o_ref[...] = y.astype(o_ref.dtype)


# --------------------------------------------------------------------------
# Buffer construction -- mirrors the PyTorch __init__ exactly.
# --------------------------------------------------------------------------
def make_pe(d_model, max_len=5000, dtype=jnp.float32):
    position = jnp.arange(0, max_len, dtype=jnp.float32)[:, None]             # (L, 1)
    div_term = jnp.exp(
        jnp.arange(0, d_model, 2, dtype=jnp.float32) * (-math.log(10000.0) / d_model)
    )                                                                           # (D/2,)
    pe = jnp.zeros((max_len, d_model), dtype=jnp.float32)
    pe = pe.at[:, 0::2].set(jnp.sin(position * div_term))
    pe = pe.at[:, 1::2].set(jnp.cos(position * div_term))
    return pe[:, None, :].astype(dtype)                                         # (L, 1, D)


# --------------------------------------------------------------------------
# Tile-size selection (mem-bound kernel: biggest tile that keeps
# 2*(x_tile + out_tile) + 2*pe_tile comfortably inside the VMEM budget on
# every generation, including v7x's 64 MiB).
# --------------------------------------------------------------------------
def _choose_tile_s(S, B, D, itemsize, budget_bytes=8 * 1024 * 1024):
    per_row = B * D * itemsize
    tS = max(1, budget_bytes // per_row)
    if tS >= S:
        return S
    if tS >= 8:
        tS = (tS // 8) * 8
    return int(tS)


# --------------------------------------------------------------------------
# Wrapper (forward pass)
# --------------------------------------------------------------------------
def positional_encoding_forward(x, timestamp, pe, *, p=0.1, training=False,
                                seed=0, alias_x_to_out=False):
    """x: (S, B, D); timestamp: (T,) -- only its length is used (pe[:T])."""
    S, B, D = x.shape
    T = int(timestamp.shape[0])
    assert T == S, f"pe[:timestamp.size(0)] must match seq_len: T={T}, S={S}"
    L = pe.shape[0]
    assert L >= S and pe.shape[1] == 1 and pe.shape[2] == D, "bad pe buffer"

    pe = pe.astype(x.dtype)  # avoid doubling pe DMA when x is bf16

    itemsize = jnp.dtype(x.dtype).itemsize
    tS = _choose_tile_s(S, B, D, itemsize)
    grid = (pl.cdiv(S, tS),)

    kernel = functools.partial(
        _pe_add_dropout_kernel,
        p=float(p), training=bool(training),
        tile_rows=tS, batch=B, d_model=D,
    )

    seed_arr = jnp.asarray([seed], dtype=jnp.int32)

    extra = {}
    if alias_x_to_out:
        # Caller can donate x: halves peak HBM footprint of this op.
        extra["input_output_aliases"] = {1: 0}

    return pl.pallas_call(
        kernel,
        out_shape=jax.ShapeDtypeStruct(x.shape, x.dtype),
        grid=grid,
        in_specs=[
            pl.BlockSpec(memory_space=pltpu.MemorySpace.SMEM),       # seed scalar
            pl.BlockSpec((tS, B, D), lambda i: (i, 0, 0)),           # x tile
            pl.BlockSpec((tS, 1, D), lambda i: (i, 0, 0)),           # pe rows (full buffer, no wrapper slice)
        ],
        out_specs=pl.BlockSpec((tS, B, D), lambda i: (i, 0, 0)),
        compiler_params=pltpu.CompilerParams(
            dimension_semantics=("parallel",),        # megacore sharding on v7x
            vmem_limit_bytes=48 * 1024 * 1024,        # safe on v7x's 64 MiB VMEM
        ),
        **extra,
    )(seed_arr, x, pe)


# --------------------------------------------------------------------------
# Demo / self-check
# --------------------------------------------------------------------------
if __name__ == "__main__":
    d_model = 32
    seq_len = 8
    batch = 2
    max_len = 5000
    p = 0.1

    key = jax.random.PRNGKey(0)
    x = jax.random.normal(key, (seq_len, batch, d_model), dtype=jnp.float32)
    timestamp = jnp.arange(seq_len, dtype=jnp.float32)  # only its length is used

    pe = make_pe(d_model, max_len, dtype=x.dtype)
    ref = x + pe[:seq_len]  # (S,1,D) broadcasts over batch

    # Eval-mode (dropout == identity): deterministic, exact reference check.
    out_eval = positional_encoding_forward(x, timestamp, pe, p=p, training=False)
    out_eval = jax.block_until_ready(out_eval)
    assert out_eval.shape == (seq_len, batch, d_model)
    assert jnp.allclose(out_eval, ref, atol=1e-6), "eval-mode mismatch"

    # Training-mode: every element must be either dropped (0) or scaled by 1/(1-p).
    out_train = positional_encoding_forward(
        x, timestamp, pe, p=p, training=True, seed=1234
    )
    out_train = jax.block_until_ready(out_train)
    assert out_train.shape == (seq_len, batch, d_model)
    scale = 1.0 / (1.0 - p)
    ok = jnp.isclose(out_train, ref * scale, atol=1e-5, rtol=1e-5) | (out_train == 0)
    assert bool(jnp.all(ok)), "training-mode dropout values inconsistent"

    print("KERNEL_OK")
</pallas_src>

<mosaic_0001>
module attributes {stable_mosaic.version = 11 : i64} {
  func.func @_pe_add_dropout_kernel(%arg0: i32, %arg1: memref<1xi32, #tpu.memory_space<smem>>, %arg2: memref<8x2x32xf32, #tpu.memory_space<vmem>>, %arg3: memref<8x1x32xf32, #tpu.memory_space<vmem>>, %arg4: memref<8x2x32xf32, #tpu.memory_space<vmem>>) attributes {dimension_semantics = [#tpu.dimension_semantics<parallel>], iteration_bounds = array<i64: 1>, scalar_prefetch = 0 : i64, scratch_operands = 0 : i64, tpu.core_type = #tpu.core_type<tc>, window_params = [{transform_indices = @transform_0, window_bounds = array<i64: 1>}, {transform_indices = @transform_1, window_bounds = array<i64: 8, 2, 32>}, {transform_indices = @transform_2, window_bounds = array<i64: 8, 1, 32>}, {transform_indices = @transform_3, window_bounds = array<i64: 8, 2, 32>}]} {
    %c0 = arith.constant 0 : index
    %c0_0 = arith.constant 0 : index
    %c0_1 = arith.constant 0 : index
    %0 = vector.load %arg2[%c0, %c0_0, %c0_1] : memref<8x2x32xf32, #tpu.memory_space<vmem>>, vector<8x2x32xf32>
    %c0_2 = arith.constant 0 : index
    %c0_3 = arith.constant 0 : index
    %c0_4 = arith.constant 0 : index
    %1 = vector.load %arg3[%c0_2, %c0_3, %c0_4] : memref<8x1x32xf32, #tpu.memory_space<vmem>>, vector<8x1x32xf32>
    %2 = vector.broadcast %1 : vector<8x1x32xf32> to vector<8x2x32xf32>
    %3 = arith.addf %0, %2 : vector<8x2x32xf32>
    %c0_5 = arith.constant 0 : index
    %c0_6 = arith.constant 0 : index
    %c0_7 = arith.constant 0 : index
    %4 = vector.load %arg4[%c0_5, %c0_6, %c0_7] : memref<8x2x32xf32, #tpu.memory_space<vmem>>, vector<8x2x32xf32>
    tpu.vector_store %arg4[%c0_5, %c0_6, %c0_7], %3 {strides = array<i32>} : memref<8x2x32xf32, #tpu.memory_space<vmem>>, vector<8x2x32xf32>,
    return
  }
  func.func @transform_0(%arg0: i32) -> i32 {
    %c0_i32 = arith.constant 0 : i32
    %c0_i32_0 = arith.constant 0 : i32
    return %c0_i32 : i32
  }
  func.func @transform_1(%arg0: i32) -> (i32, i32, i32) {
    %c0_i32 = arith.constant 0 : i32
    %c0_i32_0 = arith.constant 0 : i32
    %c0_i32_1 = arith.constant 0 : i32
    return %arg0, %c0_i32, %c0_i32_0 : i32, i32, i32
  }
  func.func @transform_2(%arg0: i32) -> (i32, i32, i32) {
    %c0_i32 = arith.constant 0 : i32
    %c0_i32_0 = arith.constant 0 : i32
    %c0_i32_1 = arith.constant 0 : i32
    return %arg0, %c0_i32, %c0_i32_0 : i32, i32, i32
  }
  func.func @transform_3(%arg0: i32) -> (i32, i32, i32) {
    %c0_i32 = arith.constant 0 : i32
    %c0_i32_0 = arith.constant 0 : i32
    %c0_i32_1 = arith.constant 0 : i32
    return %arg0, %c0_i32, %c0_i32_0 : i32, i32, i32
  }
}

</mosaic_0001>

<llo_original>
// kernel: tpu_custom_call.1
$region0: #{tpu_custom_call.1}
  #allocation0 [shape = 'u32[]', space=smem, size = 0x4, offset = 0x4, fixed_abs, tag = 'smem constant byte address 0x4 - core index']
  #allocation1 [shape = 'u32[144,128]{1,0:T(1,128)}', space=vmem, size = 0x12000, scoped, tag = 'internal scratch']
  #allocation2 [shape = 's32[1]{0:T(128)S(6)}', space=smem, size = 0x200, scoped, tag = 'scoped memory for tpu_custom_call.1']
  %s0 = inlined_call_operand.<no memory space> [shape: s32[1], index: 0, kind: input, shape index: {}]
  %s1 = inlined_call_operand.vmem [shape: f32[8,2,32], index: 1, kind: input, shape index: {}]
  %s2 = inlined_call_operand.vmem [shape: f32[5000,1,32], index: 2, kind: input, shape index: {}]
  %s3 = inlined_call_operand.hbm [shape: f32[8,2,32], index: 3, kind: output, shape index: {}]
  %s4 = sld [smem:[#allocation0]]
  $region22: #{tpu_custom_call.1} parent=0
    _
  %s6 = ssub.s32 1, %s4
  %s7 = scalar_select 0, %s6, %s4
  %8 = sst [smem:[#allocation2]] %s0
  $region1: #{tpu_custom_call.1} parent=0
    #allocation3 [shape = 'u8[8192]{0}', space=vmem, size = 0x2000, scoped, tag = 'output window, operand 0, single buffered']
    #allocation4 [shape = 's32[1]{0}', space=sflag, size = 0x4, scoped, tag = 'scoped memory for tpu_custom_call.1']
    %9 = vsyncpa [#allocation4], 0
    // Predicated region
    $region2: #{tpu_custom_call.1} parent=1 // pred_check
      _
    $region3: #{tpu_custom_call.1} parent=1 // pred_check_branch
      %11 = sbr.rel (0) target = $region5
    $region4: #{tpu_custom_call.1} parent=1 // pred_region
      _
    $region5: #{tpu_custom_call.1} parent=1 // pred_fallthru
      _
    // Predicated region
    $region6: #{tpu_custom_call.1} parent=1 // pred_check
      _
    $region7: #{tpu_custom_call.1} parent=1 // pred_check_branch
      %13 = sbr.rel (0) target = $region9
    $region8: #{tpu_custom_call.1} parent=1 // pred_region
      _
    $region9: #{tpu_custom_call.1} parent=1 // pred_fallthru
      _
    // Predicated region
    $region10: #{tpu_custom_call.1} parent=1 // pred_check
      _
    $region11: #{tpu_custom_call.1} parent=1 // pred_check_branch
      %15 = sbr.rel (0) target = $region13
    $region12: #{tpu_custom_call.1} parent=1 // pred_region
      _
    $region13: #{tpu_custom_call.1} parent=1 // pred_fallthru
      _
    %v16 = vld [vmem:[%s1] sm:$0x3]
    %v17 = vld [vmem:[%s1 + $0x2] sm:$0x3]
    %v18 = vld [vmem:[%s1 + $0x4] sm:$0x3]
    %v19 = vld [vmem:[%s1 + $0x6] sm:$0x3]
    %v20 = vld [vmem:[%s1 + $0x8] sm:$0x3]
    %v21 = vld [vmem:[%s1 + $0xa] sm:$0x3]
    %v22 = vld [vmem:[%s1 + $0xc] sm:$0x3]
    %v23 = vld [vmem:[%s1 + $0xe] sm:$0x3]
    %v24 = vld [vmem:[%s2] sm:$0x1]
    %v25 = vld [vmem:[%s2 + $0x1] sm:$0x1]
    %v26 = vld [vmem:[%s2 + $0x2] sm:$0x1]
    %v27 = vld [vmem:[%s2 + $0x3] sm:$0x1]
    %v28 = vld [vmem:[%s2 + $0x4] sm:$0x1]
    %v29 = vld [vmem:[%s2 + $0x5] sm:$0x1]
    %v30 = vld [vmem:[%s2 + $0x6] sm:$0x1]
    %v31 = vld [vmem:[%s2 + $0x7] sm:$0x1]
    %v40 = vlaneseq
    %v41 = vshrl.u32 %v40, 7
    %v42 = vsub.s32 0, %v41
    %v43 = vrot.slane %v24, %v42
    %v44 = vlaneseq
    %v45 = vshrl.u32 %v44, 7
    %v46 = vsub.s32 0, %v45
    %v47 = vrot.slane %v25, %v46
    %v48 = vlaneseq
    %v49 = vshrl.u32 %v48, 7
    %v50 = vsub.s32 0, %v49
    %v51 = vrot.slane %v26, %v50
    %v52 = vlaneseq
    %v53 = vshrl.u32 %v52, 7
    %v54 = vsub.s32 0, %v53
    %v55 = vrot.slane %v27, %v54
    %v56 = vlaneseq
    %v57 = vshrl.u32 %v56, 7
    %v58 = vsub.s32 0, %v57
    %v59 = vrot.slane %v28, %v58
    %v60 = vlaneseq
    %v61 = vshrl.u32 %v60, 7
    %v62 = vsub.s32 0, %v61
    %v63 = vrot.slane %v29, %v62
    %v64 = vlaneseq
    %v65 = vshrl.u32 %v64, 7
    %v66 = vsub.s32 0, %v65
    %v67 = vrot.slane %v30, %v66
    %v68 = vlaneseq
    %v69 = vshrl.u32 %v68, 7
    %v70 = vsub.s32 0, %v69
    %v71 = vrot.slane %v31, %v70
    %v80 = vadd.f32 %v16, %v43
    %v81 = vadd.f32 %v17, %v47
    %v82 = vadd.f32 %v18, %v51
    %v83 = vadd.f32 %v19, %v55
    %v84 = vadd.f32 %v20, %v59
    %v85 = vadd.f32 %v21, %v63
    %v86 = vadd.f32 %v22, %v67
    %v87 = vadd.f32 %v23, %v71
    %vm88 = vcmask 254976
    %89 = vst.msk [vmem:[#allocation3] sm:$0x3] %vm88, %v80
    %90 = vst.msk [vmem:[#allocation3 + $0x2] sm:$0x3] %vm88, %v81
    %91 = vst.msk [vmem:[#allocation3 + $0x4] sm:$0x3] %vm88, %v82
    %92 = vst.msk [vmem:[#allocation3 + $0x6] sm:$0x3] %vm88, %v83
    %93 = vst.msk [vmem:[#allocation3 + $0x8] sm:$0x3] %vm88, %v84
    %94 = vst.msk [vmem:[#allocation3 + $0xa] sm:$0x3] %vm88, %v85
    %95 = vst.msk [vmem:[#allocation3 + $0xc] sm:$0x3] %vm88, %v86
    %96 = vst.msk [vmem:[#allocation3 + $0xe] sm:$0x3] %vm88, %v87
    // Predicated region
    $region14: #{tpu_custom_call.1} parent=1 // pred_check
      _
    $region15: #{tpu_custom_call.1} parent=1 // pred_check_branch
      %98 = sbr.rel (0) target = $region17
    $region16: #{tpu_custom_call.1} parent=1 // pred_region
      %s100 = ssub.s32 256, 256
      %101 = vsyncadd [#allocation4], %s100
      %s102 = sshll.u32 [#allocation3], 4
      %s103 = int_to_ptr.vmem [resolvable:$true] %s102
      %108 = dma.vmem_to_hbm [thread:$0]  %s103, 256, %s3, [#allocation4], 32, 32, 2
    $region17: #{tpu_custom_call.1} parent=1 // pred_fallthru
      _
    // Predicated region
    $region18: #{tpu_custom_call.1} parent=1 // pred_check
      _
    $region19: #{tpu_custom_call.1} parent=1 // pred_check_branch
      %110 = sbr.rel (0) target = $region21
    $region20: #{tpu_custom_call.1} parent=1 // pred_region
      %111 = dma.done [#allocation4], 256
    $region21: #{tpu_custom_call.1} parent=1 // pred_fallthru
      _
    %112 = vsyncpa [#allocation4], 1

</llo_original>
